<compile_context>
chip_gen: v5e
topology: v5e:2x2
jax: 0.10.0
libtpu: 0.0.40
codegen_flags: <defaults>
</compile_context>

<pallas_src>
import math

import jax
import jax.numpy as jnp
from jax.experimental import pallas as pl
from jax.experimental.pallas import tpu as pltpu

_SMALL_BYTES = 1 << 20  # below ~1 MiB the kernel is essentially 100% overhead


def _copy_kernel(x_ref, o_ref):
    # Empty forward == no-op: move the tile through VMEM unchanged.
    # Whole-tile load/store on a lane-dense (rows, 128k) slab -> unmasked vst.
    o_ref[...] = x_ref[...]


def decoder_forward(x: jax.Array, force_kernel: bool = False) -> jax.Array:
    """Pallas stand-in for Decoder.forward (whose body is `pass`).

    Default path: identity with zero data movement (`return x`).
    `force_kernel=True`: run a tiled, lane-dense Pallas copy kernel (only when
    the flat size reshapes cleanly — no padding copies are ever materialized).
    """
    total = int(math.prod(x.shape))
    if total == 0:
        return x

    itemsize = jnp.dtype(x.dtype).itemsize
    nbytes = total * itemsize

    # Lane-dense layout without any pad/slice copies: require exact divisibility.
    if total % 1024 == 0:
        lane = 1024
    elif total % 128 == 0:
        lane = 128
    else:
        # A padded kernel path would cost more HBM traffic than it moves.
        return x

    if not force_kernel and nbytes < _SMALL_BYTES:
        # Short-circuit: the empty forward needs no kernel at all.
        return x

    rows = total // lane

    # Dtype-dependent minimum sublane multiple for legal/packed tiles.
    sublane = {1: 32, 2: 16, 4: 8}.get(itemsize, 8)

    # ~2 MiB tile: safe inside v5e's 16 MiB scoped-VMEM default when
    # double-buffered (in+out ~= 4x tile), and already ~85% of copy roofline.
    cap_rows = max(sublane, (2 * 1024 * 1024) // (lane * itemsize))
    if rows <= cap_rows:
        tile_rows = rows  # block equals full dim -> always a legal BlockSpec
    else:
        tile_rows = cap_rows  # power-of-two >= sublane multiple

    grid = (pl.cdiv(rows, tile_rows),)

    x2d = x.reshape(rows, lane)  # pure metadata reshape (contiguous), no copy

    out2d = pl.pallas_call(
        _copy_kernel,
        out_shape=jax.ShapeDtypeStruct((rows, lane), x.dtype),
        grid=grid,
        in_specs=[pl.BlockSpec((tile_rows, lane), lambda i: (i, 0))],
        out_specs=pl.BlockSpec((tile_rows, lane), lambda i: (i, 0)),
        compiler_params=pltpu.CompilerParams(
            # Independent row tiles -> shard across TensorCores on v7x megacore.
            dimension_semantics=("parallel",),
        ),
    )(x2d)

    return out2d.reshape(x.shape)


if __name__ == "__main__":
    key = jax.random.PRNGKey(0)
    # Small NCHW input consistent with a generic decoder-style module.
    x = jax.random.normal(key, (2, 4, 16, 16), dtype=jnp.float32)

    # Default (fast) path: empty forward -> identity, no kernel launched.
    y_fast = decoder_forward(x)
    jax.block_until_ready(y_fast)
    assert y_fast.shape == x.shape
    assert jnp.allclose(y_fast, x)

    # Exercise the Pallas copy kernel once on TPU (forced path).
    y_kernel = decoder_forward(x, force_kernel=True)
    jax.block_until_ready(y_kernel)
    assert y_kernel.shape == x.shape
    assert jnp.allclose(y_kernel, x)

    print("KERNEL_OK")
</pallas_src>

<mosaic_0001>
module attributes {stable_mosaic.version = 11 : i64} {
  func.func @_copy_kernel(%arg0: i32, %arg1: memref<2x1024xf32, #tpu.memory_space<vmem>>, %arg2: memref<2x1024xf32, #tpu.memory_space<vmem>>) attributes {dimension_semantics = [#tpu.dimension_semantics<parallel>], iteration_bounds = array<i64: 1>, scalar_prefetch = 0 : i64, scratch_operands = 0 : i64, tpu.core_type = #tpu.core_type<tc>, window_params = [{transform_indices = @transform_0, window_bounds = array<i64: 2, 1024>}, {transform_indices = @transform_1, window_bounds = array<i64: 2, 1024>}]} {
    %c0 = arith.constant 0 : index
    %c0_0 = arith.constant 0 : index
    %0 = vector.load %arg1[%c0, %c0_0] : memref<2x1024xf32, #tpu.memory_space<vmem>>, vector<2x1024xf32>
    %c0_1 = arith.constant 0 : index
    %c0_2 = arith.constant 0 : index
    %1 = vector.load %arg2[%c0_1, %c0_2] : memref<2x1024xf32, #tpu.memory_space<vmem>>, vector<2x1024xf32>
    tpu.vector_store %arg2[%c0_1, %c0_2], %0 {strides = array<i32>} : memref<2x1024xf32, #tpu.memory_space<vmem>>, vector<2x1024xf32>,
    return
  }
  func.func @transform_0(%arg0: i32) -> (i32, i32) {
    %c0_i32 = arith.constant 0 : i32
    %c0_i32_0 = arith.constant 0 : i32
    return %arg0, %c0_i32 : i32, i32
  }
  func.func @transform_1(%arg0: i32) -> (i32, i32) {
    %c0_i32 = arith.constant 0 : i32
    %c0_i32_0 = arith.constant 0 : i32
    return %arg0, %c0_i32 : i32, i32
  }
}

</mosaic_0001>

<llo_original>
// kernel: tpu_custom_call.1
$region0: #{tpu_custom_call.1}
  #allocation0 [shape = 'u32[]', space=smem, size = 0x4, offset = 0x4, fixed_abs, tag = 'smem constant byte address 0x4 - core index']
  #allocation1 [shape = 'u32[72,128]{1,0:T(1,128)}', space=vmem, size = 0x9000, scoped, tag = 'internal scratch']
  %s0 = inlined_call_operand.hbm [shape: f32[2,1024], index: 0, kind: input, shape index: {}]
  %s1 = inlined_call_operand.hbm [shape: f32[2,1024], index: 1, kind: output, shape index: {}]
  %s2 = sld [smem:[#allocation0]]
  $region18: #{tpu_custom_call.1} parent=0
    _
  %s4 = ssub.s32 1, %s2
  %s5 = scalar_select 0, %s4, %s2
  $region1: #{tpu_custom_call.1} parent=0
    #allocation2 [shape = 'u8[8192]{0}', space=vmem, size = 0x2000, scoped, tag = 'input window, operand 0, single buffered']
    #allocation3 [shape = 's32[1]{0}', space=sflag, size = 0x4, scoped, tag = 'scoped memory for tpu_custom_call.1']
    #allocation4 [shape = 's32[1]{0}', space=sflag, size = 0x4, scoped, tag = 'scoped memory for tpu_custom_call.1']
    #allocation5 [shape = 'u8[8192]{0}', space=vmem, size = 0x2000, scoped, tag = 'output window, operand 0, single buffered']
    %6 = vsyncpa [#allocation3], 0
    %7 = vsyncpa [#allocation4], 0
    // Predicated region
    $region2: #{tpu_custom_call.1} parent=1 // pred_check
      _
    $region3: #{tpu_custom_call.1} parent=1 // pred_check_branch
      %9 = sbr.rel (0) target = $region5
    $region4: #{tpu_custom_call.1} parent=1 // pred_region
      %11 = vsyncadd [#allocation3], 0
      %s13 = sshll.u32 %s0, 4
      %s14 = int_to_ptr.hbm [resolvable:$true] %s13
      %s15 = sshll.u32 [#allocation2], 4
      %s16 = int_to_ptr.vmem [resolvable:$true] %s15
      %18 = dma.hbm_to_vmem [thread:$0]  %s14, 256, %s16, [#allocation3]
    $region5: #{tpu_custom_call.1} parent=1 // pred_fallthru
      _
    // Predicated region
    $region6: #{tpu_custom_call.1} parent=1 // pred_check
      _
    $region7: #{tpu_custom_call.1} parent=1 // pred_check_branch
      %20 = sbr.rel (0) target = $region9
    $region8: #{tpu_custom_call.1} parent=1 // pred_region
      %22 = dma.done [#allocation3], 256
    $region9: #{tpu_custom_call.1} parent=1 // pred_fallthru
      _
    %v23 = vld [vmem:[#allocation2] sm:$0xff]
    %v24 = vld [vmem:[#allocation2 + $0x8] sm:$0xff]
    %25 = vst [vmem:[#allocation5] sm:$0xff] %v23
    %26 = vst [vmem:[#allocation5 + $0x8] sm:$0xff] %v24
    // Predicated region
    $region10: #{tpu_custom_call.1} parent=1 // pred_check
      _
    $region11: #{tpu_custom_call.1} parent=1 // pred_check_branch
      %28 = sbr.rel (0) target = $region13
    $region12: #{tpu_custom_call.1} parent=1 // pred_region
      %30 = vsyncadd [#allocation4], 0
      %s32 = sshll.u32 [#allocation5], 4
      %s33 = int_to_ptr.vmem [resolvable:$true] %s32
      %s34 = sshll.u32 %s1, 4
      %s35 = int_to_ptr.hbm [resolvable:$true] %s34
      %37 = dma.vmem_to_hbm [thread:$0]  %s33, 256, %s35, [#allocation4]
    $region13: #{tpu_custom_call.1} parent=1 // pred_fallthru
      _
    // Predicated region
    $region14: #{tpu_custom_call.1} parent=1 // pred_check
      _
    $region15: #{tpu_custom_call.1} parent=1 // pred_check_branch
      %39 = sbr.rel (0) target = $region17
    $region16: #{tpu_custom_call.1} parent=1 // pred_region
      %41 = dma.done [#allocation4], 256
    $region17: #{tpu_custom_call.1} parent=1 // pred_fallthru
      _
    %42 = vsyncpa [#allocation3], 1
    %43 = vsyncpa [#allocation4], 1

</llo_original>
